<compile_context>
chip_gen: v5e
topology: v5e:2x2
jax: 0.10.0
libtpu: 0.0.40
codegen_flags: <defaults>
</compile_context>

<pallas_src>
import functools

import jax
import jax.numpy as jnp
from jax.experimental import pallas as pl
from jax.experimental.pallas import tpu as pltpu

_F32, _BF16 = jnp.float32, jnp.bfloat16


def _round_up(x, m):
    return ((x + m - 1) // m) * m


def _vmem_cap_bytes():
    """~85% of physical VMEM per TensorCore (64 MiB on v7x, 128 MiB on v5e/v6e)."""
    try:
        info = pltpu.get_tpu_info()
        cap = getattr(info, "vmem_capacity_bytes", None)
        if cap:
            return int(0.85 * cap)
    except Exception:
        pass
    return int(0.85 * 64 * 2**20)  # conservative default = smallest generation (v7x)


# ------------------ phase 1: fused sweep  U = A @ [feat | labels],  base ------------------
def _phase1_kernel(a_ref, rhs_ref, wf_ref, bgnn_ref, bcomb_ref,
                   base_ref, ulab_ref, *, f_pad):
    a = a_ref[...]                                                        # (tm, Np) bf16
    # ONE adjacency sweep over the 128-aligned lane-concatenated RHS (#2).
    u = jnp.dot(a, rhs_ref[...], preferred_element_type=_F32)            # (tm, Fp+RCp) f32
    u_feat = u[:, :f_pad]                                                 # 128-aligned slices
    u_lab = u[:, f_pad:]
    # rowsum(A) from the already-resident panel: rides the XLU slot, no extra HBM pass (#3).
    deg = jnp.sum(a.astype(_F32), axis=1, keepdims=True)                  # (tm, 1) f32
    base = (jnp.dot(u_feat.astype(_BF16), wf_ref[...], preferred_element_type=_F32)
            + bgnn_ref[...]                                               # b_gnn
            + deg * bcomb_ref[...])                                       # rowsum(A) (x) (b_lab@W_l)
    base_ref[...] = base
    ulab_ref[...] = u_lab.astype(_BF16)


# ------------- phase 2: second sweep, per-replica ReLU mean, pool MLP, node pool ----------
def _phase2_kernel(a_ref, ulab_ref, base_ref, wstack_ref, wpool_ref, bpool_ref,
                   g_ref, *, rep_size, tm, n_real):
    t = jnp.dot(a_ref[...], ulab_ref[...], preferred_element_type=_F32)   # (tm, RCp) = A @ A @ L
    t_bf = t.astype(_BF16)
    base = base_ref[...]
    # Per-replica combined-weight matmul folded into the ReLU/accumulate loop (#4):
    # wstack[r] has only rows r*C:(r+1)*C nonzero -> t @ wstack[r] == t_r @ (W_lab@W_l).
    acc = jnp.maximum(base + jnp.dot(t_bf, wstack_ref[0], preferred_element_type=_F32), 0.0)
    for r in range(1, rep_size):
        acc = acc + jnp.maximum(
            base + jnp.dot(t_bf, wstack_ref[r], preferred_element_type=_F32), 0.0)
    mean_h = acc * (1.0 / rep_size)                                        # (tm, Ep) f32

    # gpool = Linear + ReLU (MLP([E, E], plain_last=False))
    node_repr = jnp.maximum(
        jnp.dot(mean_h.astype(_BF16), wpool_ref[...], preferred_element_type=_F32)
        + bpool_ref[...], 0.0)

    # Mask padded rows, then partial node-pool into a lane-dense (8, Ep) block (#6).
    row = pl.program_id(0) * tm + jax.lax.broadcasted_iota(jnp.int32, (tm, 1), 0)
    node_repr = node_repr * (row < n_real).astype(_F32)
    g_ref[...] = node_repr.reshape(tm // 8, 8, node_repr.shape[-1]).sum(axis=0)
    # TODO(synk): pool='sum'/'none' variants only change this finalize + the wrapper reduce.


def plain_label_gnn(labels, a_norm, feat, params):
    """labels: (rep, N, C) or (N, C) one-hot; a_norm: (N, N) normalized adjacency; feat: (N, F)."""
    if labels.ndim == 2:
        labels = labels[None]                                              # rep_size = 1 path
    rep, n, c = labels.shape
    f_dim = feat.shape[1]
    e = params["w_lab"].shape[1]

    f_pad = _round_up(max(f_dim, 1), 128)      # lane-dense feat slab (#2/#9)
    rc_pad = _round_up(max(rep * c, 1), 128)   # lane-dense packed-label slab
    e_pad = _round_up(max(e, 1), 128)          # lane-dense E
    w_tot = f_pad + rc_pad

    cap = _vmem_cap_bytes()                    # generation-aware scoped-VMEM cap (#1)

    # ---- tile selection: biggest node panel whose working set fits the scoped cap (#7) ----
    def _needs(tm_, n_pad_):
        ph1 = (2 * tm_ * n_pad_ * 2            # A panel (double-buffered, bf16)
               + 2 * n_pad_ * w_tot * 2        # fused RHS (resident)
               + 2 * f_pad * e_pad * 2         # W_f
               + 2 * tm_ * e_pad * 4           # base out
               + 2 * tm_ * rc_pad * 2          # u_lab out
               + tm_ * w_tot * 4               # U f32
               + tm_ * n_pad_ * 4              # f32 cast of A for rowsum
               + 3 * tm_ * e_pad * 4)          # live f32 temps
        ph2 = (2 * tm_ * n_pad_ * 2            # A panel
               + 2 * n_pad_ * rc_pad * 2       # u_lab (resident)
               + 2 * tm_ * e_pad * 4           # base panel
               + 2 * rep * rc_pad * e_pad * 2  # per-replica weight stack
               + 2 * e_pad * e_pad * 2         # W_pool
               + 2 * 8 * e_pad * 4             # pooled out
               + tm_ * rc_pad * 4              # t f32
               + 4 * tm_ * e_pad * 4)          # acc/mean/node_repr temps
        return ph1, ph2

    n8 = _round_up(n, 8)
    tm = 8
    for cand in (8, 16, 32, 64, 128, 256, 512, 1024):
        if cand > n8:
            break
        if max(_needs(cand, _round_up(n, cand))) <= int(0.9 * cap):
            tm = cand
    n_pad = _round_up(n, tm)
    num_panels = n_pad // tm
    ph1_need, ph2_need = _needs(tm, n_pad)
    vmem1 = int(min(cap, max(16 * 2**20, int(1.4 * ph1_need))))            # 1.4x headroom (#8)
    vmem2 = int(min(cap, max(16 * 2**20, int(1.4 * ph2_need))))

    # ------------------------------ operand packing / padding ------------------------------
    def pad2(m, rows, cols, dtype):
        m = m.astype(_F32)
        return jnp.pad(m, ((0, rows - m.shape[0]), (0, cols - m.shape[1]))).astype(dtype)

    a_p = pad2(a_norm, n_pad, n_pad, _BF16)
    feat_p = pad2(feat, n_pad, f_pad, _F32)
    lab_packed = jnp.transpose(labels, (1, 0, 2)).reshape(n, rep * c)      # replicas lane-packed
    lab_p = pad2(lab_packed, n_pad, rc_pad, _F32)
    rhs = jnp.concatenate([feat_p, lab_p], axis=1).astype(_BF16)           # (Np, Fp+RCp), fused RHS

    # Algebraic reassociation of the label path: combined weights / biases.
    w_comb = params["w_lab"].astype(_F32) @ params["w_gnn_l"].astype(_F32)   # (C, E)
    b_comb = params["b_lab"].astype(_F32) @ params["w_gnn_l"].astype(_F32)   # (1, E)

    # Per-replica combined weight stack (replaces the kron block-diagonal, #4).
    wstack = jnp.zeros((rep, rc_pad, e_pad), _F32)
    for r in range(rep):
        wstack = wstack.at[r, r * c:(r + 1) * c, :e].set(w_comb)
    wstack = wstack.astype(_BF16)

    wf_p = pad2(params["w_gnn_f"], f_pad, e_pad, _BF16)
    wpool_p = pad2(params["w_pool"], e_pad, e_pad, _BF16)
    bgnn_p = pad2(params["b_gnn"], 1, e_pad, _F32)
    bcomb_p = pad2(b_comb, 1, e_pad, _F32)
    bpool_p = pad2(params["b_pool"], 1, e_pad, _F32)

    # ------------------------------- phase 1: U and base -----------------------------------
    base, u_lab = pl.pallas_call(
        functools.partial(_phase1_kernel, f_pad=f_pad),
        out_shape=(jax.ShapeDtypeStruct((n_pad, e_pad), _F32),
                   jax.ShapeDtypeStruct((n_pad, rc_pad), _BF16)),
        grid_spec=pltpu.PrefetchScalarGridSpec(
            num_scalar_prefetch=0,
            grid=(num_panels,),
            in_specs=[pl.BlockSpec((tm, n_pad), lambda i: (i, 0)),
                      pl.BlockSpec((n_pad, w_tot), lambda i: (0, 0)),
                      pl.BlockSpec((f_pad, e_pad), lambda i: (0, 0)),
                      pl.BlockSpec((1, e_pad), lambda i: (0, 0)),
                      pl.BlockSpec((1, e_pad), lambda i: (0, 0))],
            out_specs=[pl.BlockSpec((tm, e_pad), lambda i: (i, 0)),
                       pl.BlockSpec((tm, rc_pad), lambda i: (i, 0))]),
        compiler_params=pltpu.CompilerParams(
            dimension_semantics=("parallel",), vmem_limit_bytes=vmem1),
    )(a_p, rhs, wf_p, bgnn_p, bcomb_p)

    # --------------------- phase 2: second sweep + heads + node pooling --------------------
    pooled = pl.pallas_call(
        functools.partial(_phase2_kernel, rep_size=rep, tm=tm, n_real=n),
        out_shape=jax.ShapeDtypeStruct((num_panels * 8, e_pad), _F32),
        grid_spec=pltpu.PrefetchScalarGridSpec(
            num_scalar_prefetch=0,
            grid=(num_panels,),
            in_specs=[pl.BlockSpec((tm, n_pad), lambda i: (i, 0)),
                      pl.BlockSpec((n_pad, rc_pad), lambda i: (0, 0)),
                      pl.BlockSpec((tm, e_pad), lambda i: (i, 0)),
                      pl.BlockSpec((rep, rc_pad, e_pad), lambda i: (0, 0, 0)),
                      pl.BlockSpec((e_pad, e_pad), lambda i: (0, 0)),
                      pl.BlockSpec((1, e_pad), lambda i: (0, 0))],
            out_specs=pl.BlockSpec((8, e_pad), lambda i: (i, 0))),
        compiler_params=pltpu.CompilerParams(
            dimension_semantics=("parallel",), vmem_limit_bytes=vmem2),
    )(a_p, u_lab, base, wstack, wpool_p, bpool_p)

    g_sum = jnp.sum(pooled, axis=0, keepdims=True)                         # reduce panel partials
    return g_sum[:, :e] / n                                                # pool='mean'


def _reference(labels, a_norm, feat, params):
    """Pure-JAX f32 reference of the original module's forward pass."""
    if labels.ndim == 2:
        labels = labels[None]
    rep = labels.shape[0]
    hs = []
    for r in range(rep):
        m_label = a_norm @ labels[r]
        emb = m_label @ params["w_lab"] + params["b_lab"]
        h = (a_norm @ feat) @ params["w_gnn_f"] + (a_norm @ emb) @ params["w_gnn_l"] \
            + params["b_gnn"]
        hs.append(jnp.maximum(h, 0.0))
    mean_h = jnp.mean(jnp.stack(hs), axis=0)
    node_repr = jnp.maximum(mean_h @ params["w_pool"] + params["b_pool"], 0.0)
    return jnp.mean(node_repr, axis=0, keepdims=True)


if __name__ == "__main__":
    N, C, F, E, REP = 8, 4, 16, 32, 2          # nodes, classes, feat dim, emb_dim, replicas
    key = jax.random.PRNGKey(0)
    ks = jax.random.split(key, 10)

    # Deterministic random graph: symmetric adjacency + self loops, sym-normalized.
    raw = (jax.random.uniform(ks[0], (N, N)) < 0.4)
    adj = jnp.logical_or(raw, raw.T).astype(jnp.float32)
    adj = adj.at[jnp.arange(N), jnp.arange(N)].set(1.0)
    dinv = 1.0 / jnp.sqrt(adj.sum(-1))
    a_norm = adj * dinv[:, None] * dinv[None, :]

    feat = jax.random.normal(ks[1], (N, F), jnp.float32)
    label_ids = jax.random.randint(ks[2], (REP, N), 0, C)
    labels = jax.nn.one_hot(label_ids, C, dtype=jnp.float32)   # (REP, N, C)

    params = dict(
        w_lab=0.1 * jax.random.normal(ks[3], (C, E), jnp.float32),
        b_lab=0.01 * jax.random.normal(ks[4], (1, E), jnp.float32),
        w_gnn_f=0.1 * jax.random.normal(ks[5], (F, E), jnp.float32),
        w_gnn_l=0.1 * jax.random.normal(ks[6], (E, E), jnp.float32),
        b_gnn=0.01 * jax.random.normal(ks[7], (1, E), jnp.float32),
        w_pool=0.1 * jax.random.normal(ks[8], (E, E), jnp.float32),
        b_pool=0.01 * jax.random.normal(ks[9], (1, E), jnp.float32),
    )

    # Quantize inputs/weights to bf16-representable values so the bf16-MXU kernel and the
    # f32 reference see identical data (kernel accumulates in f32).
    q = lambda x: x.astype(jnp.bfloat16).astype(jnp.float32)
    a_norm, feat, labels = q(a_norm), q(feat), q(labels)
    params = {k: q(v) for k, v in params.items()}

    out = jax.block_until_ready(plain_label_gnn(labels, a_norm, feat, params))
    ref = _reference(labels, a_norm, feat, params)
    assert out.shape == (1, E), out.shape
    assert jnp.allclose(out, ref, atol=1e-2, rtol=1e-2), (out, ref)
    print("KERNEL_OK")
</pallas_src>

<mosaic_0001>
module attributes {stable_mosaic.version = 11 : i64} {
  func.func @_phase1_kernel(%arg0: i32, %arg1: memref<8x8xbf16, #tpu.memory_space<vmem>>, %arg2: memref<8x256xbf16, #tpu.memory_space<vmem>>, %arg3: memref<128x128xbf16, #tpu.memory_space<vmem>>, %arg4: memref<1x128xf32, #tpu.memory_space<vmem>>, %arg5: memref<1x128xf32, #tpu.memory_space<vmem>>, %arg6: memref<8x128xf32, #tpu.memory_space<vmem>>, %arg7: memref<8x128xbf16, #tpu.memory_space<vmem>>) attributes {dimension_semantics = [#tpu.dimension_semantics<parallel>], iteration_bounds = array<i64: 1>, scalar_prefetch = 0 : i64, scratch_operands = 0 : i64, tpu.core_type = #tpu.core_type<tc>, window_params = [{transform_indices = @transform_0, window_bounds = array<i64: 8, 8>}, {pipeline_mode = #tpu.pipeline_mode<synchronous>, transform_indices = @transform_1, window_bounds = array<i64: 8, 256>}, {pipeline_mode = #tpu.pipeline_mode<synchronous>, transform_indices = @transform_2, window_bounds = array<i64: 128, 128>}, {pipeline_mode = #tpu.pipeline_mode<synchronous>, transform_indices = @transform_3, window_bounds = array<i64: 1, 128>}, {pipeline_mode = #tpu.pipeline_mode<synchronous>, transform_indices = @transform_4, window_bounds = array<i64: 1, 128>}, {transform_indices = @transform_5, window_bounds = array<i64: 8, 128>}, {transform_indices = @transform_6, window_bounds = array<i64: 8, 128>}]} {
    %c0 = arith.constant 0 : index
    %c0_0 = arith.constant 0 : index
    %0 = vector.load %arg1[%c0, %c0_0] : memref<8x8xbf16, #tpu.memory_space<vmem>>, vector<8x8xbf16>
    %c0_1 = arith.constant 0 : index
    %c0_2 = arith.constant 0 : index
    %1 = vector.load %arg2[%c0_1, %c0_2] : memref<8x256xbf16, #tpu.memory_space<vmem>>, vector<8x256xbf16>
    %cst = arith.constant dense<0.000000e+00> : vector<8x256xf32>
    %2 = tpu.matmul %0, %1, %cst {dimension_numbers = #tpu.dot_dimension_numbers<[1], [0], [0], [1], [0, 0, 1, 1], [], []>} : vector<8x8xbf16>, vector<8x256xbf16>, vector<8x256xf32> -> vector<8x256xf32>
    %3 = vector.extract_strided_slice %2 {offsets = [0, 0], sizes = [8, 128], strides = [1, 1]} : vector<8x256xf32> to vector<8x128xf32>
    %4 = vector.extract_strided_slice %2 {offsets = [0, 128], sizes = [8, 128], strides = [1, 1]} : vector<8x256xf32> to vector<8x128xf32>
    %5 = arith.extf %0 : vector<8x8xbf16> to vector<8x8xf32>
    %cst_3 = arith.constant dense<0.000000e+00> : vector<8xf32>
    %6 = vector.multi_reduction <add>, %5, %cst_3 [1] : vector<8x8xf32> to vector<8xf32>
    %7 = vector.shape_cast %6 : vector<8xf32> to vector<8x1xf32>
    %8 = arith.truncf %3 : vector<8x128xf32> to vector<8x128xbf16>
    %c0_4 = arith.constant 0 : index
    %c0_5 = arith.constant 0 : index
    %9 = vector.load %arg3[%c0_4, %c0_5] : memref<128x128xbf16, #tpu.memory_space<vmem>>, vector<128x128xbf16>
    %cst_6 = arith.constant dense<0.000000e+00> : vector<8x128xf32>
    %10 = tpu.matmul %8, %9, %cst_6 {dimension_numbers = #tpu.dot_dimension_numbers<[1], [0], [0], [1], [0, 0, 1, 1], [], []>} : vector<8x128xbf16>, vector<128x128xbf16>, vector<8x128xf32> -> vector<8x128xf32>
    %c0_7 = arith.constant 0 : index
    %c0_8 = arith.constant 0 : index
    %11 = vector.load %arg4[%c0_7, %c0_8] : memref<1x128xf32, #tpu.memory_space<vmem>>, vector<1x128xf32>
    %12 = vector.broadcast %11 : vector<1x128xf32> to vector<8x128xf32>
    %13 = arith.addf %10, %12 : vector<8x128xf32>
    %c0_9 = arith.constant 0 : index
    %c0_10 = arith.constant 0 : index
    %14 = vector.load %arg5[%c0_9, %c0_10] : memref<1x128xf32, #tpu.memory_space<vmem>>, vector<1x128xf32>
    %15 = vector.broadcast %7 : vector<8x1xf32> to vector<8x128xf32>
    %16 = vector.broadcast %14 : vector<1x128xf32> to vector<8x128xf32>
    %17 = arith.mulf %15, %16 : vector<8x128xf32>
    %18 = arith.addf %13, %17 : vector<8x128xf32>
    %c0_11 = arith.constant 0 : index
    %c0_12 = arith.constant 0 : index
    %19 = vector.load %arg6[%c0_11, %c0_12] : memref<8x128xf32, #tpu.memory_space<vmem>>, vector<8x128xf32>
    tpu.vector_store %arg6[%c0_11, %c0_12], %18 {strides = array<i32>} : memref<8x128xf32, #tpu.memory_space<vmem>>, vector<8x128xf32>,
    %20 = arith.truncf %4 : vector<8x128xf32> to vector<8x128xbf16>
    %c0_13 = arith.constant 0 : index
    %c0_14 = arith.constant 0 : index
    %21 = vector.load %arg7[%c0_13, %c0_14] : memref<8x128xbf16, #tpu.memory_space<vmem>>, vector<8x128xbf16>
    tpu.vector_store %arg7[%c0_13, %c0_14], %20 {strides = array<i32>} : memref<8x128xbf16, #tpu.memory_space<vmem>>, vector<8x128xbf16>,
    return
  }
  func.func @transform_0(%arg0: i32) -> (i32, i32) {
    %c0_i32 = arith.constant 0 : i32
    %c0_i32_0 = arith.constant 0 : i32
    return %arg0, %c0_i32 : i32, i32
  }
  func.func @transform_1(%arg0: i32) -> (i32, i32) {
    %c0_i32 = arith.constant 0 : i32
    %c0_i32_0 = arith.constant 0 : i32
    %c0_i32_1 = arith.constant 0 : i32
    return %c0_i32, %c0_i32_0 : i32, i32
  }
  func.func @transform_2(%arg0: i32) -> (i32, i32) {
    %c0_i32 = arith.constant 0 : i32
    %c0_i32_0 = arith.constant 0 : i32
    %c0_i32_1 = arith.constant 0 : i32
    return %c0_i32, %c0_i32_0 : i32, i32
  }
  func.func @transform_3(%arg0: i32) -> (i32, i32) {
    %c0_i32 = arith.constant 0 : i32
    %c0_i32_0 = arith.constant 0 : i32
    %c0_i32_1 = arith.constant 0 : i32
    return %c0_i32, %c0_i32_0 : i32, i32
  }
  func.func @transform_4(%arg0: i32) -> (i32, i32) {
    %c0_i32 = arith.constant 0 : i32
    %c0_i32_0 = arith.constant 0 : i32
    %c0_i32_1 = arith.constant 0 : i32
    return %c0_i32, %c0_i32_0 : i32, i32
  }
  func.func @transform_5(%arg0: i32) -> (i32, i32) {
    %c0_i32 = arith.constant 0 : i32
    %c0_i32_0 = arith.constant 0 : i32
    return %arg0, %c0_i32 : i32, i32
  }
  func.func @transform_6(%arg0: i32) -> (i32, i32) {
    %c0_i32 = arith.constant 0 : i32
    %c0_i32_0 = arith.constant 0 : i32
    return %arg0, %c0_i32 : i32, i32
  }
}

</mosaic_0001>

<llo_original>
// kernel: tpu_custom_call.1
$region0: #{tpu_custom_call.1}
  #allocation0 [shape = 'u32[]', space=smem, size = 0x4, offset = 0x4, fixed_abs, tag = 'smem constant byte address 0x4 - core index']
  #allocation1 [shape = 'u32[72,128]{1,0:T(1,128)}', space=vmem, size = 0x9000, scoped, tag = 'internal scratch']
  %s0 = inlined_call_operand.hbm [shape: bf16[8,8], index: 0, kind: input, shape index: {}]
  %s1 = inlined_call_operand.hbm [shape: bf16[8,256], index: 1, kind: input, shape index: {}]
  %s2 = inlined_call_operand.hbm [shape: bf16[128,128], index: 2, kind: input, shape index: {}]
  %s3 = inlined_call_operand.vmem [shape: f32[1,128], index: 3, kind: input, shape index: {}]
  %s4 = inlined_call_operand.vmem [shape: f32[1,128], index: 4, kind: input, shape index: {}]
  %s5 = inlined_call_operand.hbm [shape: f32[8,128], index: 5, kind: output, shape index: {0}]
  %s6 = inlined_call_operand.hbm [shape: bf16[8,128], index: 6, kind: output, shape index: {1}]
  %7 = xla_tuple %s5, %s6
  %s8 = sld [smem:[#allocation0]]
  $region50: #{tpu_custom_call.1} parent=0
    _
  %s10 = ssub.s32 1, %s8
  %s11 = scalar_select 0, %s10, %s8
  $region1: #{tpu_custom_call.1} parent=0
    #allocation2 [shape = 'u8[2048]{0}', space=vmem, size = 0x800, scoped, tag = 'input window, operand 0, single buffered']
    #allocation3 [shape = 's32[1]{0}', space=sflag, size = 0x4, scoped, tag = 'scoped memory for tpu_custom_call.1']
    #allocation4 [shape = 's32[1]{0}', space=sflag, size = 0x4, scoped, tag = 'scoped memory for tpu_custom_call.1']
    #allocation5 [shape = 'u8[4096]{0}', space=vmem, size = 0x1000, scoped, tag = 'input window, operand 1, single buffered']
    #allocation6 [shape = 's32[1]{0}', space=sflag, size = 0x4, scoped, tag = 'scoped memory for tpu_custom_call.1']
    #allocation7 [shape = 'u8[32768]{0}', space=vmem, size = 0x8000, scoped, tag = 'input window, operand 2, single buffered']
    #allocation8 [shape = 'u8[4096]{0}', space=vmem, size = 0x1000, scoped, tag = 'output window, operand 0, single buffered']
    #allocation9 [shape = 'u8[2048]{0}', space=vmem, size = 0x800, scoped, tag = 'output window, operand 1, single buffered']
    #allocation10 [shape = 's32[1]{0}', space=sflag, size = 0x4, scoped, tag = 'scoped memory for tpu_custom_call.1']
    %12 = vsyncpa [#allocation3], 0
    %13 = vsyncpa [#allocation6], 0
    %14 = vsyncpa [#allocation4], 0
    %15 = vsyncpa [#allocation10], 0
    // Predicated region
    $region2: #{tpu_custom_call.1} parent=1 // pred_check
      _
    $region3: #{tpu_custom_call.1} parent=1 // pred_check_branch
      %17 = sbr.rel (0) target = $region5
    $region4: #{tpu_custom_call.1} parent=1 // pred_region
      %19 = vsyncadd [#allocation3], 0
      %s21 = sshll.u32 %s0, 4
      %s22 = int_to_ptr.hbm [resolvable:$true] %s21
      %s23 = sshll.u32 [#allocation2], 4
      %s24 = int_to_ptr.vmem [resolvable:$true] %s23
      %26 = dma.hbm_to_vmem [thread:$0]  %s22, 64, %s24, [#allocation3]
    $region5: #{tpu_custom_call.1} parent=1 // pred_fallthru
      _
    // Predicated region
    $region6: #{tpu_custom_call.1} parent=1 // pred_check
      _
    $region7: #{tpu_custom_call.1} parent=1 // pred_check_branch
      %28 = sbr.rel (0) target = $region9
    $region8: #{tpu_custom_call.1} parent=1 // pred_region
      %30 = vsyncadd [#allocation6], 0
      %s32 = sshll.u32 %s1, 4
      %s33 = int_to_ptr.hbm [resolvable:$true] %s32
      %s34 = sshll.u32 [#allocation5], 4
      %s35 = int_to_ptr.vmem [resolvable:$true] %s34
      %37 = dma.hbm_to_vmem [thread:$0]  %s33, 128, %s35, [#allocation6]
    $region9: #{tpu_custom_call.1} parent=1 // pred_fallthru
      _
    // Predicated region
    $region10: #{tpu_custom_call.1} parent=1 // pred_check
      _
    $region11: #{tpu_custom_call.1} parent=1 // pred_check_branch
      %39 = sbr.rel (0) target = $region13
    $region12: #{tpu_custom_call.1} parent=1 // pred_region
      %41 = vsyncadd [#allocation6], 0
      %s42 = sshll.u32 %s2, 4
      %s43 = int_to_ptr.hbm [resolvable:$true] %s42
      %s44 = sshll.u32 [#allocation7], 4
      %s45 = int_to_ptr.vmem [resolvable:$true] %s44
      %50 = dma.hbm_to_vmem [thread:$0]  %s43, 1024, %s45, [#allocation6], 64, 64, 4
    $region13: #{tpu_custom_call.1} parent=1 // pred_fallthru
      _
    // Predicated region
    $region14: #{tpu_custom_call.1} parent=1 // pred_check
      _
    $region15: #{tpu_custom_call.1} parent=1 // pred_check_branch
      %52 = sbr.rel (0) target = $region17
    $region16: #{tpu_custom_call.1} parent=1 // pred_region
      _
    $region17: #{tpu_custom_call.1} parent=1 // pred_fallthru
      _
    // Predicated region
    $region18: #{tpu_custom_call.1} parent=1 // pred_check
      _
    $region19: #{tpu_custom_call.1} parent=1 // pred_check_branch
      %54 = sbr.rel (0) target = $region21
    $region20: #{tpu_custom_call.1} parent=1 // pred_region
      _
    $region21: #{tpu_custom_call.1} parent=1 // pred_fallthru
      _
    // Predicated region
    $region22: #{tpu_custom_call.1} parent=1 // pred_check
      _
    $region23: #{tpu_custom_call.1} parent=1 // pred_check_branch
      %56 = sbr.rel (0) target = $region25
    $region24: #{tpu_custom_call.1} parent=1 // pred_region
      %58 = dma.done [#allocation3], 64
    $region25: #{tpu_custom_call.1} parent=1 // pred_fallthru
      _
    // Predicated region
    $region26: #{tpu_custom_call.1} parent=1 // pred_check
      _
    $region27: #{tpu_custom_call.1} parent=1 // pred_check_branch
      %60 = sbr.rel (0) target = $region29
    $region28: #{tpu_custom_call.1} parent=1 // pred_region
      %62 = dma.done [#allocation6], 128
    $region29: #{tpu_custom_call.1} parent=1 // pred_fallthru
      _
    // Predicated region
    $region30: #{tpu_custom_call.1} parent=1 // pred_check
      _
    $region31: #{tpu_custom_call.1} parent=1 // pred_check_branch
      %64 = sbr.rel (0) target = $region33
    $region32: #{tpu_custom_call.1} parent=1 // pred_region
      %66 = dma.done [#allocation6], 1024
    $region33: #{tpu_custom_call.1} parent=1 // pred_fallthru
      _
    %v68 = vld [vmem:[#allocation2] sm:$0xf]
    %v69 = vld [vmem:[#allocation5] sm:$0xff]
    %v71 = vunpack.c.l.b16 %v69
    %v72 = vunpack.c.h.b16 %v69
    %v73 = vpack.c.b16 %v71, %v71
    %v74 = vpack.c.b16 %v72, %v72
    %vm75 = vcmask 64512
    %v77 = vsel %vm75, %v68, 0
    %vm79 = vcmask 1043456
    %v81 = vsel %vm79, %v73, 0
    %v84 = vsel %vm79, %v74, 0
    %86 = vmatpush.bf16.msra.mxu0 0
    %87 = vmatpush.bf16.msra.mxu0 0
    %88 = vmatpush.bf16.msra.mxu0 0
    %89 = vmatpush.bf16.msra.mxu0 0
    %90 = vmatpush.bf16.msra.mxu0 0
    %91 = vmatpush.bf16.msra.mxu0 0
    %92 = vmatpush.bf16.msra.mxu0 0
    %93 = vmatpush.bf16.msra.mxu0 %v81
    %94 = vmatmul.bf16.gmra.mxu0 %v77
    %v95 = vpop.f32.mrf.mxu0
    %v96 = vadd.f32 0.0, %v95
    %v97 = vpop.f32.mrf.mxu0
    %98 = vdwg.mxu0
    %99 = vmatpush.bf16.msra.mxu0 0
    %100 = vmatpush.bf16.msra.mxu0 0
    %101 = vmatpush.bf16.msra.mxu0 0
    %102 = vmatpush.bf16.msra.mxu0 0
    %103 = vmatpush.bf16.msra.mxu0 0
    %104 = vmatpush.bf16.msra.mxu0 0
    %105 = vmatpush.bf16.msra.mxu0 0
    %106 = vmatpush.bf16.msra.mxu0 %v84
    %107 = vmatmul.bf16.gmra.mxu0 %v77
    %v108 = vpop.f32.mrf.mxu0
    %v109 = vadd.f32 0.0, %v108
    %v110 = vpop.f32.mrf.mxu0
    %111 = vdwg.mxu0
    %v112 = vunpack.c.l.bf16 %v68
    %v113 = vsel %vm75, %v112, 0.0
    %114 = vadd.xlane.f32.xlu0 %v113
    %v115 = vpop.xlane.xlu0 %114
    %v116 = vpack.c.bf16 %v96, %v96
    %v117 = vld [vmem:[#allocation7] sm:$0xf]
    %v118 = vld [vmem:[#allocation7 + $0x4] sm:$0xf]
    %v119 = vld [vmem:[#allocation7 + $0x8] sm:$0xf]
    %v120 = vld [vmem:[#allocation7 + $0xc] sm:$0xf]
    %v121 = vld [vmem:[#allocation7 + $0x10] sm:$0xf]
    %v122 = vld [vmem:[#allocation7 + $0x14] sm:$0xf]
    %v123 = vld [vmem:[#allocation7 + $0x18] sm:$0xf]
    %v124 = vld [vmem:[#allocation7 + $0x1c] sm:$0xf]
    %v125 = vld [vmem:[#allocation7 + $0x20] sm:$0xf]
    %v126 = vld [vmem:[#allocation7 + $0x24] sm:$0xf]
    %v127 = vld [vmem:[#allocation7 + $0x28] sm:$0xf]
    %v128 = vld [vmem:[#allocation7 + $0x2c] sm:$0xf]
    %v129 = vld [vmem:[#allocation7 + $0x30] sm:$0xf]
    %v130 = vld [vmem:[#allocation7 + $0x34] sm:$0xf]
    %v131 = vld [vmem:[#allocation7 + $0x38] sm:$0xf]
    %v132 = vld [vmem:[#allocation7 + $0x3c] sm:$0xf]
    %v133 = vld [vmem:[%s3] sm:$0x1]
    %v135 = vperm.slane %v133, 0
    %v153 = vunpack.c.l.b16 %v117
    %v154 = vunpack.c.l.b16 %v118
    %v155 = vunpack.c.l.b16 %v119
    %v156 = vunpack.c.l.b16 %v120
    %v157 = vunpack.c.l.b16 %v121
    %v158 = vunpack.c.l.b16 %v122
    %v159 = vunpack.c.l.b16 %v123
    %v160 = vunpack.c.l.b16 %v124
    %v161 = vunpack.c.l.b16 %v125
    %v162 = vunpack.c.l.b16 %v126
    %v163 = vunpack.c.l.b16 %v127
    %v164 = vunpack.c.l.b16 %v128
    %v165 = vunpack.c.l.b16 %v129
    %v166 = vunpack.c.l.b16 %v130
    %v167 = vunpack.c.l.b16 %v131
    %v168 = vunpack.c.l.b16 %v132
    %v169 = vpack.c.b16 %v154, %v153
    %v170 = vpack.c.b16 %v156, %v155
    %v171 = vpack.c.b16 %v158, %v157
    %v172 = vpack.c.b16 %v160, %v159
    %v173 = vpack.c.b16 %v162, %v161
    %v174 = vpack.c.b16 %v164, %v163
    %v175 = vpack.c.b16 %v166, %v165
    %v176 = vpack.c.b16 %v168, %v167
    %185 = vmatpush.bf16.msra.mxu0 %v176
    %186 = vmatpush.bf16.msra.mxu0 %v175
    %187 = vmatpush.bf16.msra.mxu0 %v174
    %188 = vmatpush.bf16.msra.mxu0 %v173
    %189 = vmatpush.bf16.msra.mxu0 %v172
    %190 = vmatpush.bf16.msra.mxu0 %v171
    %191 = vmatpush.bf16.msra.mxu0 %v170
    %192 = vmatpush.bf16.msra.mxu0 %v169
    %193 = vmatmul.bf16.gmra.mxu0 %v116
    %v194 = vpop.f32.mrf.mxu0
    %v195 = vadd.f32 %v135, %v194
    %v196 = vpop.f32.mrf.mxu0
    %197 = vdwg.mxu0
    %v198 = vld [vmem:[%s4] sm:$0x1]
    %v200 = vperm.slane %v198, 0
    %v202 = vmul.f32 %v115, %v200
    %v203 = vadd.f32 %v195, %v202
    %204 = vst [vmem:[#allocation8] sm:$0xff] %v203
    %v205 = vpack.c.bf16 %v109, %v109
    %206 = vst [vmem:[#allocation9] sm:$0xf] %v205
    // Predicated region
    $region34: #{tpu_custom_call.1} parent=1 // pred_check
      _
    $region35: #{tpu_custom_call.1} parent=1 // pred_check_branch
      %208 = sbr.rel (0) target = $region37
    $region36: #{tpu_custom_call.1} parent=1 // pred_region
      %210 = vsyncadd [#allocation4], 0
      %s212 = sshll.u32 [#allocation8], 4
      %s213 = int_to_ptr.vmem [resolvable:$true] %s212
      %s214 = sshll.u32 %s5, 4
      %s215 = int_to_ptr.hbm [resolvable:$true] %s214
      %217 = dma.vmem_to_hbm [thread:$0]  %s213, 128, %s215, [#allocation4]
    $region37: #{tpu_custom_call.1} parent=1 // pred_fallthru
      _
    // Predicated region
    $region38: #{tpu_custom_call.1} parent=1 // pred_check
      _
    $region39: #{tpu_custom_call.1} parent=1 // pred_check_branch
      %219 = sbr.rel (0) target = $region41
    $region40: #{tpu_custom_call.1} parent=1 // pred_region
      %221 = vsyncadd [#allocation10], 0
      %s223 = sshll.u32 [#allocation9], 4
      %s224 = int_to_ptr.vmem [resolvable:$true] %s223
      %s225 = sshll.u32 %s6, 4
      %s226 = int_to_ptr.hbm [resolvable:$true] %s225
      %228 = dma.vmem_to_hbm [thread:$0]  %s224, 64, %s226, [#allocation10]
    $region41: #{tpu_custom_call.1} parent=1 // pred_fallthru
      _
    // Predicated region
    $region42: #{tpu_custom_call.1} parent=1 // pred_check
      _
    $region43: #{tpu_custom_call.1} parent=1 // pred_check_branch
      %230 = sbr.rel (0) target = $region45
    $region44: #{tpu_custom_call.1} parent=1 // pred_region
      %232 = dma.done [#allocation4], 128
    $region45: #{tpu_custom_call.1} parent=1 // pred_fallthru
      _
    // Predicated region
    $region46: #{tpu_custom_call.1} parent=1 // pred_check
      _
    $region47: #{tpu_custom_call.1} parent=1 // pred_check_branch
      %234 = sbr.rel (0) target = $region49
    $region48: #{tpu_custom_call.1} parent=1 // pred_region
      %236 = dma.done [#allocation10], 64
    $region49: #{tpu_custom_call.1} parent=1 // pred_fallthru
      _
    %237 = vsyncpa [#allocation3], 1
    %238 = vsyncpa [#allocation6], 1
    %239 = vsyncpa [#allocation4], 1
    %240 = vsyncpa [#allocation10], 1

</llo_original>
